<compile_context>
chip_gen: v5e
topology: v5e:2x2
jax: 0.10.0
libtpu: 0.0.40
codegen_flags: <defaults>
</compile_context>

<pallas_src>
import functools

import jax
import jax.numpy as jnp
from jax.experimental import pallas as pl
from jax.experimental.pallas import tpu as pltpu


def _round_up(x, m):
    return (x + m - 1) // m * m


def _vmem_capacity_bytes():
    """Per-core VMEM capacity; conservative default if the query fails."""
    try:
        info = pltpu.get_tpu_info()
        cap = int(getattr(info, "vmem_capacity_bytes", 0) or 0)
        if cap > 0:
            return cap
    except Exception:
        pass
    return 64 << 20  # v7x per-TensorCore VMEM (smallest of v5e/v6e/v7x)


def _choose_tiles(batch, num_classes, itemsize):
    """Pick (tb, tc, vmem_limit).

    Per-grid-step working set is ~ tb * tc * (2*itemsize + 16) bytes:
    the double-buffered input tile in its original dtype plus ~4 live
    (tb, tc) f32 temporaries (cast copy, shifted, exp, masked-sum).
    """
    row_align = max(8, 32 // itemsize)       # (8,128) f32, (16,128) bf16, (32,128) i8
    bytes_per_elem = 2 * itemsize + 16

    cap = _vmem_capacity_bytes()
    if cap >= (100 << 20):                   # 128 MiB parts: v5e / v6e
        vmem_limit = 96 << 20
        chunk_cap = 24 << 20
    else:                                    # 64 MiB parts: v7x
        vmem_limit = min(44 << 20, cap * 11 // 16)
        chunk_cap = 12 << 20
    budget = max(vmem_limit - (4 << 20), 8 << 20)

    b_aligned = _round_up(batch, row_align)

    # Prefer keeping the whole class row in a single chunk.
    tb_full = (budget // (num_classes * bytes_per_elem)) // row_align * row_align
    if tb_full >= row_align:
        tb = min(tb_full, b_aligned)
        tc = num_classes                     # full row -> no column padding / mask
    else:
        # Large vocabulary: chunk the class axis (online log-sum-exp).
        tb = min(b_aligned, 8 * row_align)
        chunk_budget = min(chunk_cap, budget)
        tc = (chunk_budget // (tb * bytes_per_elem)) // 128 * 128
        while tc < 128 and tb > row_align:
            tb -= row_align
            tc = (chunk_budget // (tb * bytes_per_elem)) // 128 * 128
        tc = max(tc, 128)
    return tb, tc, vmem_limit


def _label_smoothing_kernel(logits_ref, xtgt_ref, nonpad_ref, loss_ref,
                            m_sc, s_sc, sumx_sc, *,
                            eps, num_classes, needs_col_mask):
    j = pl.program_id(1)  # class-chunk index (reduction axis, last in grid)

    @pl.when(j == 0)
    def _init():
        m_sc[...] = jnp.full(m_sc.shape, -jnp.inf, m_sc.dtype)
        s_sc[...] = jnp.zeros(s_sc.shape, s_sc.dtype)
        sumx_sc[...] = jnp.zeros(sumx_sc.shape, sumx_sc.dtype)

    # Cast on the VMEM tile (HBM traffic stays at the input dtype width).
    x = logits_ref[...].astype(jnp.float32)                  # (TB, TC)
    tc = x.shape[-1]

    if needs_col_mask:
        # Only the last chunk actually has padded columns; the compare is a
        # (1, TC) row broadcast, traced only when padding exists.
        col = jax.lax.broadcasted_iota(jnp.int32, (1, tc), 1) + j * tc
        valid = col < num_classes                             # (1, TC)
        x_max_in = jnp.where(valid, x, -jnp.inf)
        x_sum_in = jnp.where(valid, x, 0.0)
    else:
        x_max_in = x
        x_sum_in = x

    # Online (flash-style) max / sum-exp / sum-x update over class chunks.
    m_prev = m_sc[...]                                        # (TB, 1)
    m_new = jnp.maximum(m_prev, jnp.max(x_max_in, axis=-1, keepdims=True))
    alpha = jnp.exp(m_prev - m_new)                           # chunk 0: exp(-inf)=0
    p = jnp.exp(x_max_in - m_new)                             # padded cols -> 0
    s_sc[...] = alpha * s_sc[...] + jnp.sum(p, axis=-1, keepdims=True)
    sumx_sc[...] = sumx_sc[...] + jnp.sum(x_sum_in, axis=-1, keepdims=True)
    m_sc[...] = m_new

    @pl.when(j == pl.num_programs(1) - 1)
    def _finalize():
        # loss = -[(1-eps-eps/C)*(x_tgt - LSE) + (eps/C)*(sum_x - C*LSE)]
        lse = m_sc[...] + jnp.log(s_sc[...])                  # (TB, 1)
        c = float(num_classes)
        loss = -((1.0 - eps - eps / c) * (xtgt_ref[...] - lse)
                 + (eps / c) * (sumx_sc[...] - c * lse))
        loss_ref[...] = loss * nonpad_ref[...]


def label_smoothing_loss(output, target, *, label_smoothing, tgt_vocab_size,
                         ignore_index=-100, _tile_b=None, _tile_c=None):
    """output: (B, C) float (any float dtype); target: (B,) int.
    Returns the per-example loss (B,) in f32 (matches the PyTorch module)."""
    assert 0.0 < label_smoothing <= 1.0
    B, C = output.shape
    assert C == tgt_vocab_size

    target = target.astype(jnp.int32)
    non_pad = (target != ignore_index).astype(jnp.float32).reshape(B, 1)
    tgt_clean = jnp.where(target == ignore_index, 0, target).reshape(B, 1)
    # O(B)-byte gather of the target logit (replaces the in-kernel iota pass).
    x_tgt = jnp.take_along_axis(output, tgt_clean, axis=1).astype(jnp.float32)

    itemsize = jnp.dtype(output.dtype).itemsize
    tb, tc, vmem_limit = _choose_tiles(B, C, itemsize)
    if _tile_b is not None:
        tb = int(_tile_b)
    if _tile_c is not None:
        tc = int(_tile_c)
    assert tc == C or tc % 128 == 0

    pad_b = _round_up(B, tb)
    pad_c = _round_up(C, tc)
    needs_col_mask = pad_c != C

    # Pad batch (zero logits, zero target-logit, zero mask -> zero loss) and,
    # if chunking, pad classes (masked out in-kernel).
    if pad_b != B:
        output = jnp.pad(output, ((0, pad_b - B), (0, 0)))
        x_tgt = jnp.pad(x_tgt, ((0, pad_b - B), (0, 0)))
        non_pad = jnp.pad(non_pad, ((0, pad_b - B), (0, 0)))
    if pad_c != C:
        output = jnp.pad(output, ((0, 0), (0, pad_c - C)))

    kernel = functools.partial(
        _label_smoothing_kernel,
        eps=float(label_smoothing),
        num_classes=int(tgt_vocab_size),
        needs_col_mask=needs_col_mask,
    )

    grid_spec = pltpu.PrefetchScalarGridSpec(
        num_scalar_prefetch=0,
        grid=(pad_b // tb, pad_c // tc),
        in_specs=[
            pl.BlockSpec((tb, tc), lambda i, j: (i, j)),   # logits (orig dtype)
            pl.BlockSpec((tb, 1), lambda i, j: (i, 0)),    # target logit (f32)
            pl.BlockSpec((tb, 1), lambda i, j: (i, 0)),    # non-pad mask (f32)
        ],
        out_specs=pl.BlockSpec((tb, 1), lambda i, j: (i, 0)),
        scratch_shapes=[
            pltpu.VMEM((tb, 1), jnp.float32),   # running max
            pltpu.VMEM((tb, 1), jnp.float32),   # running sum(exp(x - m))
            pltpu.VMEM((tb, 1), jnp.float32),   # running sum(x)
        ],
    )

    loss = pl.pallas_call(
        kernel,
        out_shape=jax.ShapeDtypeStruct((pad_b, 1), jnp.float32),
        grid_spec=grid_spec,
        compiler_params=pltpu.CompilerParams(
            dimension_semantics=("parallel", "arbitrary"),
            vmem_limit_bytes=vmem_limit,
        ),
    )(output, x_tgt, non_pad)
    return loss[:B, 0]


def _reference(output, target, *, eps, num_classes, ignore_index=-100):
    non_pad = (target != ignore_index).astype(jnp.float32)
    tgt = jnp.where(target == ignore_index, 0, target)
    one_hot = jax.nn.one_hot(tgt, num_classes, dtype=jnp.float32)
    one_hot = one_hot * (1 - eps) + (1 - one_hot) * eps / num_classes
    log_prb = jax.nn.log_softmax(output.astype(jnp.float32), axis=-1)
    loss = -(one_hot * log_prb).sum(axis=-1)
    return loss * non_pad


if __name__ == "__main__":
    key = jax.random.PRNGKey(0)
    eps = 0.1
    ignore_index = -100

    # --- small f32 case ----------------------------------------------------
    B, V = 8, 32
    k1, k2 = jax.random.split(key)
    logits = jax.random.normal(k1, (B, V), dtype=jnp.float32)
    target = jax.random.randint(k2, (B,), 0, V, dtype=jnp.int32)
    target = target.at[1].set(ignore_index)
    target = target.at[5].set(ignore_index)

    loss = label_smoothing_loss(logits, target, label_smoothing=eps,
                                tgt_vocab_size=V, ignore_index=ignore_index)
    jax.block_until_ready(loss)
    ref = _reference(logits, target, eps=eps, num_classes=V,
                     ignore_index=ignore_index)
    assert jnp.allclose(loss, ref, atol=1e-5, rtol=1e-5), (loss, ref)

    # --- bf16 logits (kept bf16 in HBM, cast on the VMEM tile) --------------
    logits_bf16 = logits.astype(jnp.bfloat16)
    loss_bf = label_smoothing_loss(logits_bf16, target, label_smoothing=eps,
                                   tgt_vocab_size=V, ignore_index=ignore_index)
    jax.block_until_ready(loss_bf)
    ref_bf = _reference(logits_bf16, target, eps=eps, num_classes=V,
                        ignore_index=ignore_index)
    assert jnp.allclose(loss_bf, ref_bf, atol=2e-2, rtol=2e-2), (loss_bf, ref_bf)

    # --- forced class-axis chunking (exercises online LSE + column mask) ----
    B2, V2 = 8, 300
    k3, k4 = jax.random.split(k1)
    logits2 = jax.random.normal(k3, (B2, V2), dtype=jnp.float32) * 3.0
    target2 = jax.random.randint(k4, (B2,), 0, V2, dtype=jnp.int32)
    target2 = target2.at[0].set(ignore_index)
    loss2 = label_smoothing_loss(logits2, target2, label_smoothing=eps,
                                 tgt_vocab_size=V2, ignore_index=ignore_index,
                                 _tile_b=8, _tile_c=128)
    jax.block_until_ready(loss2)
    ref2 = _reference(logits2, target2, eps=eps, num_classes=V2,
                      ignore_index=ignore_index)
    assert jnp.allclose(loss2, ref2, atol=1e-4, rtol=1e-4), (loss2, ref2)

    print("KERNEL_OK")
</pallas_src>

<mosaic_0001>
module attributes {stable_mosaic.version = 11 : i64} {
  func.func @_label_smoothing_kernel(%arg0: i32, %arg1: i32, %arg2: memref<8x32xf32, #tpu.memory_space<vmem>>, %arg3: memref<8x1xf32, #tpu.memory_space<vmem>>, %arg4: memref<8x1xf32, #tpu.memory_space<vmem>>, %arg5: memref<8x1xf32, #tpu.memory_space<vmem>>, %arg6: memref<8x1xf32, #tpu.memory_space<vmem>>, %arg7: memref<8x1xf32, #tpu.memory_space<vmem>>, %arg8: memref<8x1xf32, #tpu.memory_space<vmem>>) attributes {dimension_semantics = [#tpu.dimension_semantics<parallel>, #tpu.dimension_semantics<arbitrary>], iteration_bounds = array<i64: 1, 1>, scalar_prefetch = 0 : i64, scratch_operands = 3 : i64, tpu.core_type = #tpu.core_type<tc>, window_params = [{transform_indices = @transform_0, window_bounds = array<i64: 8, 32>}, {transform_indices = @transform_1, window_bounds = array<i64: 8, 1>}, {transform_indices = @transform_2, window_bounds = array<i64: 8, 1>}, {transform_indices = @transform_3, window_bounds = array<i64: 8, 1>}]} {
    %c0_i32 = arith.constant 0 : i32
    %0 = arith.cmpi eq, %arg1, %c0_i32 : i32
    %1 = arith.extui %0 : i1 to i32
    %c0_i32_0 = arith.constant 0 : i32
    %2 = arith.cmpi ne, %1, %c0_i32_0 : i32
    scf.if %2 {
      %cst_18 = arith.constant 0xFF800000 : f32
      %28 = vector.broadcast %cst_18 : f32 to vector<8x1xf32>
      %c0_19 = arith.constant 0 : index
      %c0_20 = arith.constant 0 : index
      %29 = vector.load %arg6[%c0_19, %c0_20] : memref<8x1xf32, #tpu.memory_space<vmem>>, vector<8x1xf32>
      tpu.vector_store %arg6[%c0_19, %c0_20], %28 {strides = array<i32>} : memref<8x1xf32, #tpu.memory_space<vmem>>, vector<8x1xf32>,
      %cst_21 = arith.constant 0.000000e+00 : f32
      %30 = vector.broadcast %cst_21 : f32 to vector<8x1xf32>
      %c0_22 = arith.constant 0 : index
      %c0_23 = arith.constant 0 : index
      %31 = vector.load %arg7[%c0_22, %c0_23] : memref<8x1xf32, #tpu.memory_space<vmem>>, vector<8x1xf32>
      tpu.vector_store %arg7[%c0_22, %c0_23], %30 {strides = array<i32>} : memref<8x1xf32, #tpu.memory_space<vmem>>, vector<8x1xf32>,
      %cst_24 = arith.constant 0.000000e+00 : f32
      %32 = vector.broadcast %cst_24 : f32 to vector<8x1xf32>
      %c0_25 = arith.constant 0 : index
      %c0_26 = arith.constant 0 : index
      %33 = vector.load %arg8[%c0_25, %c0_26] : memref<8x1xf32, #tpu.memory_space<vmem>>, vector<8x1xf32>
      tpu.vector_store %arg8[%c0_25, %c0_26], %32 {strides = array<i32>} : memref<8x1xf32, #tpu.memory_space<vmem>>, vector<8x1xf32>,
    } else {
    }
    %c0 = arith.constant 0 : index
    %c0_1 = arith.constant 0 : index
    %3 = vector.load %arg2[%c0, %c0_1] : memref<8x32xf32, #tpu.memory_space<vmem>>, vector<8x32xf32>
    %c0_2 = arith.constant 0 : index
    %c0_3 = arith.constant 0 : index
    %4 = vector.load %arg6[%c0_2, %c0_3] : memref<8x1xf32, #tpu.memory_space<vmem>>, vector<8x1xf32>
    %cst = arith.constant dense<0xFF800000> : vector<8xf32>
    %5 = vector.multi_reduction <maximumf>, %3, %cst [1] : vector<8x32xf32> to vector<8xf32>
    %6 = vector.shape_cast %5 : vector<8xf32> to vector<8x1xf32>
    %7 = arith.maximumf %4, %6 : vector<8x1xf32>
    %8 = arith.subf %4, %7 : vector<8x1xf32>
    %9 = math.exp %8 : vector<8x1xf32>
    %10 = vector.broadcast %7 : vector<8x1xf32> to vector<8x32xf32>
    %11 = arith.subf %3, %10 : vector<8x32xf32>
    %12 = math.exp %11 : vector<8x32xf32>
    %c0_4 = arith.constant 0 : index
    %c0_5 = arith.constant 0 : index
    %13 = vector.load %arg7[%c0_4, %c0_5] : memref<8x1xf32, #tpu.memory_space<vmem>>, vector<8x1xf32>
    %14 = arith.mulf %9, %13 : vector<8x1xf32>
    %cst_6 = arith.constant dense<0.000000e+00> : vector<8xf32>
    %15 = vector.multi_reduction <add>, %12, %cst_6 [1] : vector<8x32xf32> to vector<8xf32>
    %16 = vector.shape_cast %15 : vector<8xf32> to vector<8x1xf32>
    %17 = arith.addf %14, %16 : vector<8x1xf32>
    %c0_7 = arith.constant 0 : index
    %c0_8 = arith.constant 0 : index
    %18 = vector.load %arg7[%c0_7, %c0_8] : memref<8x1xf32, #tpu.memory_space<vmem>>, vector<8x1xf32>
    tpu.vector_store %arg7[%c0_7, %c0_8], %17 {strides = array<i32>} : memref<8x1xf32, #tpu.memory_space<vmem>>, vector<8x1xf32>,
    %c0_9 = arith.constant 0 : index
    %c0_10 = arith.constant 0 : index
    %19 = vector.load %arg8[%c0_9, %c0_10] : memref<8x1xf32, #tpu.memory_space<vmem>>, vector<8x1xf32>
    %cst_11 = arith.constant dense<0.000000e+00> : vector<8xf32>
    %20 = vector.multi_reduction <add>, %3, %cst_11 [1] : vector<8x32xf32> to vector<8xf32>
    %21 = vector.shape_cast %20 : vector<8xf32> to vector<8x1xf32>
    %22 = arith.addf %19, %21 : vector<8x1xf32>
    %c0_12 = arith.constant 0 : index
    %c0_13 = arith.constant 0 : index
    %23 = vector.load %arg8[%c0_12, %c0_13] : memref<8x1xf32, #tpu.memory_space<vmem>>, vector<8x1xf32>
    tpu.vector_store %arg8[%c0_12, %c0_13], %22 {strides = array<i32>} : memref<8x1xf32, #tpu.memory_space<vmem>>, vector<8x1xf32>,
    %c0_14 = arith.constant 0 : index
    %c0_15 = arith.constant 0 : index
    %24 = vector.load %arg6[%c0_14, %c0_15] : memref<8x1xf32, #tpu.memory_space<vmem>>, vector<8x1xf32>
    tpu.vector_store %arg6[%c0_14, %c0_15], %7 {strides = array<i32>} : memref<8x1xf32, #tpu.memory_space<vmem>>, vector<8x1xf32>,
    %c0_i32_16 = arith.constant 0 : i32
    %25 = arith.cmpi eq, %arg1, %c0_i32_16 : i32
    %26 = arith.extui %25 : i1 to i32
    %c0_i32_17 = arith.constant 0 : i32
    %27 = arith.cmpi ne, %26, %c0_i32_17 : i32
    scf.if %27 {
      %c0_18 = arith.constant 0 : index
      %c0_19 = arith.constant 0 : index
      %28 = vector.load %arg6[%c0_18, %c0_19] : memref<8x1xf32, #tpu.memory_space<vmem>>, vector<8x1xf32>
      %c0_20 = arith.constant 0 : index
      %c0_21 = arith.constant 0 : index
      %29 = vector.load %arg7[%c0_20, %c0_21] : memref<8x1xf32, #tpu.memory_space<vmem>>, vector<8x1xf32>
      %30 = math.log %29 : vector<8x1xf32>
      %31 = arith.addf %28, %30 : vector<8x1xf32>
      %c0_22 = arith.constant 0 : index
      %c0_23 = arith.constant 0 : index
      %32 = vector.load %arg3[%c0_22, %c0_23] : memref<8x1xf32, #tpu.memory_space<vmem>>, vector<8x1xf32>
      %33 = arith.subf %32, %31 : vector<8x1xf32>
      %cst_24 = arith.constant 8.968750e-01 : f32
      %34 = vector.broadcast %cst_24 : f32 to vector<8x1xf32>
      %35 = arith.mulf %34, %33 : vector<8x1xf32>
      %c0_25 = arith.constant 0 : index
      %c0_26 = arith.constant 0 : index
      %36 = vector.load %arg8[%c0_25, %c0_26] : memref<8x1xf32, #tpu.memory_space<vmem>>, vector<8x1xf32>
      %cst_27 = arith.constant 3.200000e+01 : f32
      %37 = vector.broadcast %cst_27 : f32 to vector<8x1xf32>
      %38 = arith.mulf %37, %31 : vector<8x1xf32>
      %39 = arith.subf %36, %38 : vector<8x1xf32>
      %cst_28 = arith.constant 3.125000e-03 : f32
      %40 = vector.broadcast %cst_28 : f32 to vector<8x1xf32>
      %41 = arith.mulf %40, %39 : vector<8x1xf32>
      %42 = arith.addf %35, %41 : vector<8x1xf32>
      %cst_29 = arith.constant 0.000000e+00 : f32
      %43 = vector.broadcast %cst_29 : f32 to vector<8x1xf32>
      %44 = arith.subf %43, %42 : vector<8x1xf32>
      %c0_30 = arith.constant 0 : index
      %c0_31 = arith.constant 0 : index
      %45 = vector.load %arg4[%c0_30, %c0_31] : memref<8x1xf32, #tpu.memory_space<vmem>>, vector<8x1xf32>
      %46 = arith.mulf %44, %45 : vector<8x1xf32>
      %c0_32 = arith.constant 0 : index
      %c0_33 = arith.constant 0 : index
      %47 = vector.load %arg5[%c0_32, %c0_33] : memref<8x1xf32, #tpu.memory_space<vmem>>, vector<8x1xf32>
      tpu.vector_store %arg5[%c0_32, %c0_33], %46 {strides = array<i32>} : memref<8x1xf32, #tpu.memory_space<vmem>>, vector<8x1xf32>,
    } else {
    }
    return
  }
  func.func @transform_0(%arg0: i32, %arg1: i32) -> (i32, i32) {
    %c0_i32 = arith.constant 0 : i32
    return %arg0, %arg1 : i32, i32
  }
  func.func @transform_1(%arg0: i32, %arg1: i32) -> (i32, i32) {
    %c0_i32 = arith.constant 0 : i32
    %c0_i32_0 = arith.constant 0 : i32
    return %arg0, %c0_i32 : i32, i32
  }
  func.func @transform_2(%arg0: i32, %arg1: i32) -> (i32, i32) {
    %c0_i32 = arith.constant 0 : i32
    %c0_i32_0 = arith.constant 0 : i32
    return %arg0, %c0_i32 : i32, i32
  }
  func.func @transform_3(%arg0: i32, %arg1: i32) -> (i32, i32) {
    %c0_i32 = arith.constant 0 : i32
    %c0_i32_0 = arith.constant 0 : i32
    return %arg0, %c0_i32 : i32, i32
  }
}

</mosaic_0001>

<llo_original>
// kernel: tpu_custom_call.1
$region0: #{tpu_custom_call.1}
  #allocation0 [shape = 'u32[]', space=smem, size = 0x4, offset = 0x4, fixed_abs, tag = 'smem constant byte address 0x4 - core index']
  #allocation1 [shape = 'u32[72,128]{1,0:T(1,128)}', space=vmem, size = 0x9000, scoped, tag = 'internal scratch']
  #allocation2 [shape = 'f32[8,1]{1,0:T(8,128)}', space=vmem, size = 0x1000, scoped, tag = 'scratch operand']
  #allocation3 [shape = 'f32[8,1]{1,0:T(8,128)}', space=vmem, size = 0x1000, scoped, tag = 'scratch operand']
  #allocation4 [shape = 'f32[8,1]{1,0:T(8,128)}', space=vmem, size = 0x1000, scoped, tag = 'scratch operand']
  %s0 = inlined_call_operand.vmem [shape: f32[8,32], index: 0, kind: input, shape index: {}]
  %s1 = inlined_call_operand.vmem [shape: f32[8,1], index: 1, kind: input, shape index: {}]
  %s2 = inlined_call_operand.vmem [shape: f32[8,1], index: 2, kind: input, shape index: {}]
  %s3 = inlined_call_operand.vmem [shape: f32[8,1], index: 3, kind: output, shape index: {}]
  %s4 = sld [smem:[#allocation0]]
  $region30: #{tpu_custom_call.1} parent=0
    _
  %s6 = ssub.s32 1, %s4
  %s7 = scalar_select 0, %s6, %s4
  // Predicated region
  $region2: #{tpu_custom_call.1} parent=0 // pred_check
    _
  $region3: #{tpu_custom_call.1} parent=0 // pred_check_branch
    %9 = sbr.rel (0) target = $region5
  $region4: #{tpu_custom_call.1} parent=0 // pred_region
    _
  $region5: #{tpu_custom_call.1} parent=0 // pred_fallthru
    _
  // Predicated region
  $region6: #{tpu_custom_call.1} parent=0 // pred_check
    _
  $region7: #{tpu_custom_call.1} parent=0 // pred_check_branch
    %11 = sbr.rel (0) target = $region9
  $region8: #{tpu_custom_call.1} parent=0 // pred_region
    _
  $region9: #{tpu_custom_call.1} parent=0 // pred_fallthru
    _
  // Predicated region
  $region10: #{tpu_custom_call.1} parent=0 // pred_check
    _
  $region11: #{tpu_custom_call.1} parent=0 // pred_check_branch
    %13 = sbr.rel (0) target = $region13
  $region12: #{tpu_custom_call.1} parent=0 // pred_region
    _
  $region13: #{tpu_custom_call.1} parent=0 // pred_fallthru
    _
  %p14 = scmp.eq.s32.totalorder 0, 0
  // Predicated region
  $region14: #{tpu_custom_call.1} parent=0 // pred_check
    %p15 = pneg %p14
  $region15: #{tpu_custom_call.1} parent=0 // pred_check_branch
    %17 = sbr.rel (%p15) target = $region17
  $region16: #{tpu_custom_call.1} parent=0 // pred_region
    %vm18 = vcmask 7168
    %19 = vst.msk [vmem:[#allocation2] sm:$0xff] %vm18, -inf
    %20 = vst.msk [vmem:[#allocation3] sm:$0xff] %vm18, 0.0
    %21 = vst.msk [vmem:[#allocation4] sm:$0xff] %vm18, 0.0
  $region17: #{tpu_custom_call.1} parent=0 // pred_fallthru
    _
  %v22 = vld [vmem:[%s0] sm:$0xff]
  %v23 = vld [vmem:[#allocation2] sm:$0xff]
  %vm24 = vcmask 261120
  %v25 = vsel %vm24, %v22, -inf
  %26 = vmax.xlane.f32.xlu0 %v25
  %v27 = vpop.xlane.xlu0 %26
  %v28 = vmax.f32 %v23, %v27
  %v29 = vsub.f32 %v23, %v28
  %v30 = vmul.f32 %v29, 1.442695
  %v31 = vpow.pop %v30
  %33 = vset.pattern.permute.xlu0 0
  %34 = vperm.xlu0 %33, %v28
  %v35 = vpop.permute.xlu0 %34
  %v37 = vsub.f32 %v22, %v35
  %v38 = vmul.f32 %v37, 1.442695
  %v39 = vpow.pop %v38
  %v40 = vld [vmem:[#allocation3] sm:$0xff]
  %v41 = vmul.f32 %v31, %v40
  %v42 = vsel %vm24, %v39, 0.0
  %43 = vadd.xlane.f32.xlu0 %v42
  %v44 = vpop.xlane.xlu0 %43
  %v45 = vadd.f32 %v41, %v44
  %vm46 = vcmask 7168
  %47 = vst.msk [vmem:[#allocation3] sm:$0xff] %vm46, %v45
  %v48 = vld [vmem:[#allocation4] sm:$0xff]
  %v49 = vsel %vm24, %v22, 0.0
  %50 = vadd.xlane.f32.xlu0 %v49
  %v51 = vpop.xlane.xlu0 %50
  %v52 = vadd.f32 %v48, %v51
  %53 = vst.msk [vmem:[#allocation4] sm:$0xff] %vm46, %v52
  %54 = vst.msk [vmem:[#allocation2] sm:$0xff] %vm46, %v28
  // Predicated region
  $region18: #{tpu_custom_call.1} parent=0 // pred_check
    %p55 = pneg %p14
  $region19: #{tpu_custom_call.1} parent=0 // pred_check_branch
    %57 = sbr.rel (%p55) target = $region21
  $region20: #{tpu_custom_call.1} parent=0 // pred_region
    %v58 = vld [vmem:[#allocation2] sm:$0xff]
    %v59 = vld [vmem:[#allocation3] sm:$0xff]
    %v60 = vlog2.pop %v59
    %v61 = vmul.f32 %v60, 0.6931472
    %v62 = vadd.f32 %v58, %v61
    %v63 = vld [vmem:[%s1] sm:$0xff]
    %v64 = vsub.f32 %v63, %v62
    %v65 = vmul.f32 %v64, 0.896875
    %v66 = vld [vmem:[#allocation4] sm:$0xff]
    %v67 = vmul.f32 %v62, 32.0
    %v68 = vsub.f32 %v66, %v67
    %v69 = vmul.f32 %v68, 0.003125
    %v70 = vadd.f32 %v65, %v69
    %v71 = vsub.f32 0.0, %v70
    %v72 = vld [vmem:[%s2] sm:$0xff]
    %v73 = vmul.f32 %v71, %v72
    %74 = vst.msk [vmem:[%s3] sm:$0xff] %vm46, %v73
  $region21: #{tpu_custom_call.1} parent=0 // pred_fallthru
    _
  // Predicated region
  $region22: #{tpu_custom_call.1} parent=0 // pred_check
    _
  $region23: #{tpu_custom_call.1} parent=0 // pred_check_branch
    %76 = sbr.rel (0) target = $region25
  $region24: #{tpu_custom_call.1} parent=0 // pred_region
    _
  $region25: #{tpu_custom_call.1} parent=0 // pred_fallthru
    _
  // Predicated region
  $region26: #{tpu_custom_call.1} parent=0 // pred_check
    _
  $region27: #{tpu_custom_call.1} parent=0 // pred_check_branch
    %78 = sbr.rel (0) target = $region29
  $region28: #{tpu_custom_call.1} parent=0 // pred_region
    _
  $region29: #{tpu_custom_call.1} parent=0 // pred_fallthru
    _

</llo_original>
